<compile_context>
chip_gen: v7x
topology: tpu7x:2x2x1
jax: 0.10.0
libtpu: 0.0.40
codegen_flags: <defaults>
</compile_context>

<pallas_src>
import jax
import jax.numpy as jnp
from jax.experimental import pallas as pl
from jax.experimental.pallas import tpu as pltpu

_LANE = 128
_SUBLANE = 8


def _reward_head_kernel(h_ref, w_ref, b_ref, o_ref):
    # h_ref: (TM, hidden)   VMEM, compute dtype (bf16)
    # w_ref: (hidden, 128)  VMEM, compute dtype; real weight in lane 0, rest 0
    # b_ref: (1,)           SMEM, float32 scalar
    # o_ref: (TM, 1)        VMEM, output dtype
    y = jnp.dot(h_ref[...], w_ref[...],
                preferred_element_type=jnp.float32)        # (TM, 128) f32, MXU
    o_ref[...] = (y[:, 0:1] + b_ref[0]).astype(o_ref.dtype)  # take lane 0 + bias


def _round_up(x, n):
    return ((x + n - 1) // n) * n


def _pick_tm(m, hidden, itemsize):
    """Row-tile size: keep the two in-flight h buffers <= ~16 MiB total."""
    per_buffer_budget = 8 * 1024 * 1024            # TM * hidden * itemsize <= 8 MiB
    tm = per_buffer_budget // (hidden * itemsize)
    if tm >= 256:
        tm = (tm // 256) * 256                     # MXU-friendly row count
    else:
        tm = max(_SUBLANE, (tm // _SUBLANE) * _SUBLANE)   # large-hidden fallback
    tm = min(tm, 4096)
    tm = min(tm, _round_up(m, _SUBLANE))           # don't exceed the problem
    # v7x has 2 TensorCores sharing the "parallel" grid axis: make sure a
    # reasonably sized problem produces at least 2 row tiles.
    if m > 2 * 256 and pl.cdiv(m, tm) < 2:
        tm = _round_up(pl.cdiv(m, 2), 256)
    return tm


def reward_head(h, weight, bias, *, compute_dtype=jnp.bfloat16):
    """Equivalent of torch.nn.Linear(hidden, 1)(h).squeeze(-1).

    h:      (batch, seq, hidden)
    weight: (1, hidden)   (PyTorch Linear weight layout)
    bias:   (1,)
    returns (batch, seq), dtype of h.
    """
    batch, seq, hidden = h.shape
    m = batch * seq
    out_dtype = h.dtype
    c_itemsize = jnp.dtype(compute_dtype).itemsize

    tm = _pick_tm(m, hidden, c_itemsize)
    grid = (pl.cdiv(m, tm),)                       # partial last block; no jnp.pad

    # bf16 streaming inputs (f32 accumulation in the kernel).
    h2d = h.reshape(m, hidden).astype(compute_dtype)
    w_col = jnp.zeros((hidden, _LANE), compute_dtype).at[:, 0].set(
        weight.reshape(hidden).astype(compute_dtype))
    b = bias.reshape(1).astype(jnp.float32)

    # Explicit scoped-VMEM budget: 2 double-buffered h tiles + weight block +
    # output tiles + headroom (covers v5e's 16 MiB default for large hidden).
    tile_bytes = tm * hidden * c_itemsize
    wcol_bytes = hidden * _LANE * c_itemsize
    out_tile_bytes = _round_up(tm, _SUBLANE) * _LANE * 4   # (tm,1) f32, lane-padded
    vmem_limit = max(
        32 * 1024 * 1024,
        2 * (tile_bytes + wcol_bytes + out_tile_bytes) + 4 * 1024 * 1024)

    out = pl.pallas_call(
        _reward_head_kernel,
        out_shape=jax.ShapeDtypeStruct((m, 1), out_dtype),
        grid=grid,
        in_specs=[
            # h tiles: (TM, hidden); hidden kept un-tiled (full extent) so a
            # non-128-multiple hidden stays legal.
            pl.BlockSpec((tm, hidden), lambda i: (i, 0)),
            # weight column block: same block index every step -> single DMA.
            pl.BlockSpec((hidden, _LANE), lambda i: (0, 0)),
            # bias: scalar parked in SMEM.
            pl.BlockSpec(memory_space=pltpu.MemorySpace.SMEM),
        ],
        out_specs=pl.BlockSpec((tm, 1), lambda i: (i, 0)),
        compiler_params=pltpu.CompilerParams(
            dimension_semantics=("parallel",),     # v7x: shard row tiles over 2 TCs
            vmem_limit_bytes=int(vmem_limit),
        ),
        cost_estimate=pl.CostEstimate(
            flops=2 * m * hidden,
            bytes_accessed=(m * hidden * c_itemsize
                            + hidden * _LANE * c_itemsize
                            + m * jnp.dtype(out_dtype).itemsize),
            transcendentals=0,
        ),
    )(h2d, w_col, b)

    return out.reshape(batch, seq)                 # squeeze(-1)


if __name__ == "__main__":
    batch, seq, hidden = 2, 8, 32

    key = jax.random.PRNGKey(0)
    k_h, k_w, k_b = jax.random.split(key, 3)

    # Deterministic synthetic parameters (shapes match nn.Linear(hidden, 1)).
    bound = 1.0 / (hidden ** 0.5)
    h = jax.random.normal(k_h, (batch, seq, hidden), dtype=jnp.float32)
    weight = jax.random.uniform(k_w, (1, hidden), minval=-bound, maxval=bound,
                                dtype=jnp.float32)
    bias = jax.random.uniform(k_b, (1,), minval=-bound, maxval=bound,
                              dtype=jnp.float32)

    out = jax.block_until_ready(reward_head(h, weight, bias))

    # Reference 1: same bf16-quantized inputs, f32 accumulation (kernel math).
    h_q = h.astype(jnp.bfloat16).astype(jnp.float32)
    w_q = weight.astype(jnp.bfloat16).astype(jnp.float32)
    ref_q = (h_q @ w_q.T + bias).squeeze(-1)
    # Reference 2: full f32 module math (tolerance covers bf16 input rounding).
    ref_f32 = (h @ weight.T + bias).squeeze(-1)

    assert out.shape == (batch, seq)
    assert out.dtype == h.dtype
    assert jnp.allclose(out, ref_q, atol=1e-4, rtol=1e-4)
    assert jnp.allclose(out, ref_f32, atol=5e-2, rtol=5e-2)

    print("KERNEL_OK")
</pallas_src>

<mosaic_0001>
module attributes {stable_mosaic.version = 11 : i64} {
  func.func @_reward_head_kernel(%arg0: i32, %arg1: memref<16x32xbf16, #tpu.memory_space<vmem>>, %arg2: memref<32x128xbf16, #tpu.memory_space<vmem>>, %arg3: memref<1xf32, #tpu.memory_space<smem>>, %arg4: memref<16x1xf32, #tpu.memory_space<vmem>>) attributes {dimension_semantics = [#tpu.dimension_semantics<parallel>], iteration_bounds = array<i64: 1>, scalar_prefetch = 0 : i64, scratch_operands = 0 : i64, tpu.core_type = #tpu.core_type<tc>, window_params = [{transform_indices = @transform_0, window_bounds = array<i64: 16, 32>}, {pipeline_mode = #tpu.pipeline_mode<synchronous>, transform_indices = @transform_1, window_bounds = array<i64: 32, 128>}, {transform_indices = @transform_2, window_bounds = array<i64: 1>}, {transform_indices = @transform_3, window_bounds = array<i64: 16, 1>}]} {
    %c0 = arith.constant 0 : index
    %c0_0 = arith.constant 0 : index
    %0 = vector.load %arg1[%c0, %c0_0] : memref<16x32xbf16, #tpu.memory_space<vmem>>, vector<16x32xbf16>
    %c0_1 = arith.constant 0 : index
    %c0_2 = arith.constant 0 : index
    %1 = vector.load %arg2[%c0_1, %c0_2] : memref<32x128xbf16, #tpu.memory_space<vmem>>, vector<32x128xbf16>
    %cst = arith.constant dense<0.000000e+00> : vector<16x128xf32>
    %2 = tpu.matmul %0, %1, %cst {dimension_numbers = #tpu.dot_dimension_numbers<[1], [0], [0], [1], [0, 0, 1, 1], [], []>} : vector<16x32xbf16>, vector<32x128xbf16>, vector<16x128xf32> -> vector<16x128xf32>
    %3 = vector.extract_strided_slice %2 {offsets = [0, 0], sizes = [16, 1], strides = [1, 1]} : vector<16x128xf32> to vector<16x1xf32>
    %c0_3 = arith.constant 0 : index
    %4 = memref.load %arg3[%c0_3] : memref<1xf32, #tpu.memory_space<smem>>
    %5 = vector.broadcast %4 : f32 to vector<16x1xf32>
    %6 = arith.addf %3, %5 : vector<16x1xf32>
    %c0_4 = arith.constant 0 : index
    %c0_5 = arith.constant 0 : index
    %7 = vector.load %arg4[%c0_4, %c0_5] : memref<16x1xf32, #tpu.memory_space<vmem>>, vector<16x1xf32>
    tpu.vector_store %arg4[%c0_4, %c0_5], %6 {strides = array<i32>} : memref<16x1xf32, #tpu.memory_space<vmem>>, vector<16x1xf32>,
    return
  }
  func.func @transform_0(%arg0: i32) -> (i32, i32) {
    %c0_i32 = arith.constant 0 : i32
    %c0_i32_0 = arith.constant 0 : i32
    return %arg0, %c0_i32 : i32, i32
  }
  func.func @transform_1(%arg0: i32) -> (i32, i32) {
    %c0_i32 = arith.constant 0 : i32
    %c0_i32_0 = arith.constant 0 : i32
    %c0_i32_1 = arith.constant 0 : i32
    return %c0_i32, %c0_i32_0 : i32, i32
  }
  func.func @transform_2(%arg0: i32) -> i32 {
    %c0_i32 = arith.constant 0 : i32
    %c0_i32_0 = arith.constant 0 : i32
    return %c0_i32 : i32
  }
  func.func @transform_3(%arg0: i32) -> (i32, i32) {
    %c0_i32 = arith.constant 0 : i32
    %c0_i32_0 = arith.constant 0 : i32
    return %arg0, %c0_i32 : i32, i32
  }
}

</mosaic_0001>

<llo_original>
// kernel: tpu_custom_call.1
$region0: #{tpu_custom_call.1}
  #allocation0 [shape = 'u32[]', space=smem, size = 0x4, offset = 0x4, fixed_abs, tag = 'smem constant byte address 0x4 - core index']
  #allocation1 [shape = 'u32[144,128]{1,0:T(1,128)}', space=vmem, size = 0x12000, scoped, tag = 'internal scratch']
  #allocation2 [shape = 'f32[1]{0:T(128)S(6)}', space=smem, size = 0x200, scoped, tag = 'scoped memory for tpu_custom_call.1']
  %s0 = inlined_call_operand.hbm [shape: bf16[16,32], index: 0, kind: input, shape index: {}]
  %s1 = inlined_call_operand.hbm [shape: bf16[32,128], index: 1, kind: input, shape index: {}]
  %s2 = inlined_call_operand.<no memory space> [shape: f32[1], index: 2, kind: input, shape index: {}]
  %s3 = inlined_call_operand.vmem [shape: f32[16,1], index: 3, kind: output, shape index: {}]
  %s4 = sld [smem:[#allocation0]]
  $region30: #{tpu_custom_call.1} parent=0
    _
  %s6 = ssub.s32 1, %s4
  %s7 = scalar_select 0, %s6, %s4
  %8 = sst [smem:[#allocation2]] %s2
  $region1: #{tpu_custom_call.1} parent=0
    #allocation3 [shape = 'u8[4096]{0}', space=vmem, size = 0x1000, scoped, tag = 'input window, operand 0, single buffered']
    #allocation4 [shape = 's32[1]{0}', space=sflag, size = 0x4, scoped, tag = 'scoped memory for tpu_custom_call.1']
    #allocation5 [shape = 'u8[8192]{0}', space=vmem, size = 0x2000, scoped, tag = 'input window, operand 1, single buffered']
    #allocation6 [shape = 's32[1]{0}', space=sflag, size = 0x4, scoped, tag = 'scoped memory for tpu_custom_call.1']
    %9 = vsyncpa [#allocation4], 0
    %10 = vsyncpa [#allocation6], 0
    // Predicated region
    $region2: #{tpu_custom_call.1} parent=1 // pred_check
      _
    $region3: #{tpu_custom_call.1} parent=1 // pred_check_branch
      %12 = sbr.rel (0) target = $region5
    $region4: #{tpu_custom_call.1} parent=1 // pred_region
      %s14 = ssub.s32 128, 128
      %15 = vsyncadd [#allocation4], %s14
      %s16 = sshll.u32 [#allocation3], 4
      %s17 = int_to_ptr.vmem [resolvable:$true] %s16
      %22 = dma.hbm_to_vmem [thread:$0]  %s0, 128, %s17, [#allocation4], 64, 64, 4
    $region5: #{tpu_custom_call.1} parent=1 // pred_fallthru
      _
    // Predicated region
    $region6: #{tpu_custom_call.1} parent=1 // pred_check
      _
    $region7: #{tpu_custom_call.1} parent=1 // pred_check_branch
      %24 = sbr.rel (0) target = $region9
    $region8: #{tpu_custom_call.1} parent=1 // pred_region
      %s26 = ssub.s32 256, 256
      %27 = vsyncadd [#allocation6], %s26
      %s28 = sshll.u32 [#allocation5], 4
      %s29 = int_to_ptr.vmem [resolvable:$true] %s28
      %34 = dma.hbm_to_vmem [thread:$0]  %s1, 256, %s29, [#allocation6], 64, 64, 4
    $region9: #{tpu_custom_call.1} parent=1 // pred_fallthru
      _
    // Predicated region
    $region10: #{tpu_custom_call.1} parent=1 // pred_check
      _
    $region11: #{tpu_custom_call.1} parent=1 // pred_check_branch
      %36 = sbr.rel (0) target = $region13
    $region12: #{tpu_custom_call.1} parent=1 // pred_region
      _
    $region13: #{tpu_custom_call.1} parent=1 // pred_fallthru
      _
    // Predicated region
    $region14: #{tpu_custom_call.1} parent=1 // pred_check
      _
    $region15: #{tpu_custom_call.1} parent=1 // pred_check_branch
      %38 = sbr.rel (0) target = $region17
    $region16: #{tpu_custom_call.1} parent=1 // pred_region
      %39 = dma.done [#allocation4], 128
    $region17: #{tpu_custom_call.1} parent=1 // pred_fallthru
      _
    // Predicated region
    $region18: #{tpu_custom_call.1} parent=1 // pred_check
      _
    $region19: #{tpu_custom_call.1} parent=1 // pred_check_branch
      %41 = sbr.rel (0) target = $region21
    $region20: #{tpu_custom_call.1} parent=1 // pred_region
      %42 = dma.done [#allocation6], 256
    $region21: #{tpu_custom_call.1} parent=1 // pred_fallthru
      _
    %v44 = vld [vmem:[#allocation3] sm:$0xf]
    %v45 = vld [vmem:[#allocation3 + $0x4] sm:$0xf]
    %v46 = vld [vmem:[#allocation5] sm:$0xf]
    %v47 = vld [vmem:[#allocation5 + $0x4] sm:$0xf]
    %v48 = vld [vmem:[#allocation5 + $0x8] sm:$0xf]
    %v49 = vld [vmem:[#allocation5 + $0xc] sm:$0xf]
    %v52 = vunpack.c.l.b16 %v44
    %v53 = vunpack.c.l.b16 %v45
    %v54 = vpack.c.b16 %v53, %v52
    %v59 = vunpack.c.l.b16 %v46
    %v60 = vunpack.c.l.b16 %v47
    %v61 = vunpack.c.l.b16 %v48
    %v62 = vunpack.c.l.b16 %v49
    %v63 = vpack.c.b16 %v60, %v59
    %v64 = vpack.c.b16 %v62, %v61
    %vm67 = vcmask 261120
    %v69 = vsel %vm67, %v54, 0
    %71 = vmatprep.subr.bf16.mxu0 0
    %72 = vmatpush1.bf16.msra.mxu0 %v63
    %73 = vmatprep.subr.bf16.mxu0 0
    %74 = vmatpush1.bf16.msra.mxu0 %v64
    %75 = vmatprep.subr.bf16.mxu0 0
    %76 = vmatpush1.bf16.msra.mxu0 0
    %77 = vmatprep.subr.bf16.mxu0 0
    %78 = vmatpush1.bf16.msra.mxu0 0
    %79 = vmatprep.subr.bf16.mxu0 0
    %80 = vmatpush1.bf16.msra.mxu0 0
    %81 = vmatprep.subr.bf16.mxu0 0
    %82 = vmatpush1.bf16.msra.mxu0 0
    %83 = vmatprep.subr.bf16.mxu0 0
    %84 = vmatpush1.bf16.msra.mxu0 0
    %85 = vmatprep.subr.bf16.mxu0 0
    %86 = vmatpush1.bf16.msra.mxu0 0
    %87 = vmatprep.subr.bf16.mxu0 0
    %88 = vmatpush1.bf16.msra.mxu0 0
    %89 = vmatprep.subr.bf16.mxu0 0
    %90 = vmatpush1.bf16.msra.mxu0 0
    %91 = vmatprep.subr.bf16.mxu0 0
    %92 = vmatpush1.bf16.msra.mxu0 0
    %93 = vmatprep.subr.bf16.mxu0 0
    %94 = vmatpush1.bf16.msra.mxu0 0
    %95 = vmatprep.subr.bf16.mxu0 0
    %96 = vmatpush1.bf16.msra.mxu0 0
    %97 = vmatprep.subr.bf16.mxu0 0
    %98 = vmatpush1.bf16.msra.mxu0 0
    %99 = vmatprep.subr.bf16.mxu0 0
    %100 = vmatpush1.bf16.msra.mxu0 0
    %101 = vmatprep.subr.bf16.mxu0 0
    %102 = vmatpush1.bf16.msra.mxu0 0
    %103 = vmatprep.mubr.bf16.mxu0 0
    %104 = vmatmul.mubr.bf16.gmra.mrb[0].mxu0 %v69
    %v105 = vpop.f32.mrb[0].mxu0
    %v106 = vadd.f32 0.0, %v105
    %v107 = vpop.f32.mrb[0].mxu0
    %v108 = vpop.f32.mrb[0].mxu0
    %v109 = vadd.f32 0.0, %v108
    %v110 = vpop.f32.mrb[0].mxu0
    %111 = vdwg.mxu0
    %s112 = sld [smem:[#allocation2]]
    %v113 = vstv %s112
    %v114 = vadd.f32 %v106, %v113
    %v115 = vadd.f32 %v109, %v113
    %vm116 = vcmask 7168
    %117 = vst.msk [vmem:[%s3] sm:$0xff] %vm116, %v114
    %118 = vst.msk [vmem:[%s3 + $0x8] sm:$0xff] %vm116, %v115
    // Predicated region
    $region22: #{tpu_custom_call.1} parent=1 // pred_check
      _
    $region23: #{tpu_custom_call.1} parent=1 // pred_check_branch
      %120 = sbr.rel (0) target = $region25
    $region24: #{tpu_custom_call.1} parent=1 // pred_region
      _
    $region25: #{tpu_custom_call.1} parent=1 // pred_fallthru
      _
    // Predicated region
    $region26: #{tpu_custom_call.1} parent=1 // pred_check
      _
    $region27: #{tpu_custom_call.1} parent=1 // pred_check_branch
      %122 = sbr.rel (0) target = $region29
    $region28: #{tpu_custom_call.1} parent=1 // pred_region
      _
    $region29: #{tpu_custom_call.1} parent=1 // pred_fallthru
      _
    %123 = vsyncpa [#allocation4], 1
    %124 = vsyncpa [#allocation6], 1

</llo_original>
